<compile_context>
chip_gen: v7x
topology: tpu7x:2x2x1
jax: 0.10.0
libtpu: 0.0.40
codegen_flags: <defaults>
</compile_context>

<pallas_src>
import functools

import jax
import jax.numpy as jnp
from jax.experimental import pallas as pl
from jax.experimental.pallas import tpu as pltpu


def _highway_cnn_kernel(x_ref, cw_ref, cb_ref, hw_ref, hb_ref, o_ref, *, K, W):
    """One batch tile of conv(K, D) + ReLU followed by the highway gate.

    x_ref  : (b_tile, W, D) f32   raw (unpadded) input rows for this tile
    cw_ref : (K*D, D)       bf16  conv weight, rows ordered (tap, in-embed)
    cb_ref : (1, D)         f32   conv bias
    hw_ref : (2*W, W)       bf16  [fc_w; gate_w] stacked
    hb_ref : (2*W, 1)       f32   [fc_b; gate_b] stacked
    o_ref  : (b_tile, W, D)       output, already in the final (N, W, D) layout
    """
    b_tile, _, D = x_ref.shape
    half = K // 2

    # ---- Build zero-padded conv taps in-kernel (no HBM duplication) ----
    x = x_ref[...]                                          # (b, W, D) f32
    zpad = jnp.zeros((b_tile, half, D), x.dtype)
    xpad = jnp.concatenate([zpad, x, zpad], axis=1)         # (b, W+K-1, D)

    # Concatenate the K shifted windows along the channel axis -> one matmul
    # with a K*D-deep contraction (instead of K separate D-deep matmuls).
    taps = jnp.concatenate([xpad[:, k:k + W, :] for k in range(K)], axis=-1)
    taps = taps.reshape(b_tile * W, K * D).astype(cw_ref.dtype)

    conv = jnp.dot(taps, cw_ref[...], preferred_element_type=jnp.float32)
    conv = jnp.maximum(conv + cb_ref[...], 0.0)             # (b*W, D) f32, ReLU
    conv3 = conv.reshape(b_tile, W, D)                      # free leading-dim split

    # ---- Highway: per-sample fused [fc; gate] matmul (weight is O(1)) ----
    hw = hw_ref[...]
    hb = hb_ref[...]
    for b in range(b_tile):                                 # b_tile <= 8, static unroll
        cvb = conv3[b]                                      # (W, D) f32
        h = jnp.dot(hw, cvb.astype(hw.dtype),
                    preferred_element_type=jnp.float32) + hb    # (2W, D) f32
        fc = jnp.tanh(h[:W])                                # (W, D)
        gate = jax.nn.sigmoid(h[W:])                        # (W, D)
        o_ref[b] = (fc * gate + cvb * (1.0 - gate)).astype(o_ref.dtype)


def _pick_b_tile(n, max_tile=8):
    """Largest divisor of n that is <= max_tile, preferring >=2 (even) tiles
    so the parallel grid axis can use both TensorCores on v7x."""
    divs = [b for b in range(min(n, max_tile), 0, -1) if n % b == 0]
    for b in divs:
        if (n // b) >= 2 and (n // b) % 2 == 0:
            return b
    for b in divs:
        if (n // b) >= 2:
            return b
    return divs[0]


def make_highway_cnn(conv_w, conv_b, fc_w, fc_b, gate_w, gate_b, *, b_tile=None):
    """conv_w: (K, D, D) = torch Conv2d weight (D, 1, K, D) transposed to
    (tap, in-embed, out-channel).  fc_w/gate_w: (W, W) torch Linear (out, in).
    Returns a jitted fwd(x) for x of shape (N, W, D) -> (N, W, D)."""
    K, D, D_out = conv_w.shape
    assert D == D_out, "module uses out_channels == embed_dim"
    assert K % 2 == 1, "module restricts to odd kernel sizes"
    W = fc_w.shape[0]

    # Constant prep hoisted out of the per-call path.
    cw = conv_w.reshape(K * D, D).astype(jnp.bfloat16)                 # (K*D, D)
    cb = conv_b.reshape(1, D).astype(jnp.float32)                      # (1, D)
    hw = jnp.concatenate([fc_w, gate_w], axis=0).astype(jnp.bfloat16)  # (2W, W)
    hb = jnp.concatenate([fc_b, gate_b], axis=0).reshape(2 * W, 1).astype(jnp.float32)

    @jax.jit
    def fwd(x):
        N = x.shape[0]
        assert x.shape == (N, W, D), x.shape
        bt = _pick_b_tile(N) if b_tile is None else b_tile
        assert N % bt == 0, "batch must be divisible by the batch tile"
        n_tiles = N // bt

        kern = functools.partial(_highway_cnn_kernel, K=K, W=W)
        flops = 2 * N * W * (K * D) * D + 2 * N * (2 * W) * W * D
        bytes_accessed = (N * W * D * 4 * 2            # x in, out
                          + cw.size * 2 + hw.size * 2
                          + cb.size * 4 + hb.size * 4)

        return pl.pallas_call(
            kern,
            out_shape=jax.ShapeDtypeStruct((N, W, D), x.dtype),
            grid_spec=pltpu.PrefetchScalarGridSpec(
                num_scalar_prefetch=0,
                grid=(n_tiles,),
                in_specs=[
                    pl.BlockSpec((bt, W, D), lambda i: (i, 0, 0)),   # x batch tile
                    pl.BlockSpec((K * D, D), lambda i: (0, 0)),      # conv weight
                    pl.BlockSpec((1, D), lambda i: (0, 0)),          # conv bias
                    pl.BlockSpec((2 * W, W), lambda i: (0, 0)),      # [fc; gate] weight
                    pl.BlockSpec((2 * W, 1), lambda i: (0, 0)),      # [fc; gate] bias
                ],
                out_specs=pl.BlockSpec((bt, W, D), lambda i: (i, 0, 0)),
            ),
            compiler_params=pltpu.CompilerParams(
                dimension_semantics=("parallel",)),
            cost_estimate=pl.CostEstimate(
                flops=flops,
                transcendentals=2 * N * W * D,
                bytes_accessed=bytes_accessed),
        )(x, cw, cb, hw, hb)

    return fwd


def highway_cnn_ref(x, conv_w, conv_b, fc_w, fc_b, gate_w, gate_b):
    """Pure-JAX f32 reference mirroring the PyTorch forward ((N, W, D) output)."""
    N, seq, D = x.shape
    K = conv_w.shape[0]
    pad = K // 2
    xp = jnp.pad(x, ((0, 0), (pad, pad), (0, 0)))
    taps = jnp.stack([xp[:, k:k + seq, :] for k in range(K)], axis=2)  # (N,W,K,D)
    conv = jnp.einsum("nwkd,kdc->nwc", taps, conv_w) + conv_b[None, None, :]
    conv = jax.nn.relu(conv)                                           # (N, W, D)
    y = jnp.einsum("ow,nwd->nod", fc_w, conv) + fc_b[None, :, None]
    g = jnp.einsum("ow,nwd->nod", gate_w, conv) + gate_b[None, :, None]
    t, s = jnp.tanh(y), jax.nn.sigmoid(g)
    return t * s + conv * (1.0 - s)                                    # (N, W, D)


if __name__ == "__main__":
    # Small shapes consistent with the module: batch N=4, seq W=16, embed D=32,
    # kernel_sizes=[3] (module requires a single odd kernel size).
    # TODO(synk): the torch module re-initializes fc1/gate_layer with fresh
    # random weights inside forward(); here they are fixed parameters.
    N, W, D, K = 4, 16, 32, 3

    key = jax.random.PRNGKey(0)
    ks = jax.random.split(key, 7)
    x = jax.random.normal(ks[0], (N, W, D), jnp.float32)

    # Deterministic synthetic parameters (torch Conv2d weight (D,1,K,D) -> (K,D,D)).
    conv_w = 0.1 * jax.random.normal(ks[1], (K, D, D), jnp.float32)
    conv_b = 0.1 * jax.random.normal(ks[2], (D,), jnp.float32)
    fc_w = 0.1 * jax.random.normal(ks[3], (W, W), jnp.float32)     # Linear(W, W)
    fc_b = 0.1 * jax.random.normal(ks[4], (W,), jnp.float32)
    gate_w = 0.1 * jax.random.normal(ks[5], (W, W), jnp.float32)   # Linear(W, W)
    gate_b = 0.1 * jax.random.normal(ks[6], (W,), jnp.float32)

    fwd = make_highway_cnn(conv_w, conv_b, fc_w, fc_b, gate_w, gate_b)
    out = jax.block_until_ready(fwd(x))

    ref = highway_cnn_ref(x, conv_w, conv_b, fc_w, fc_b, gate_w, gate_b)
    assert out.shape == (N, W, D), out.shape
    # bf16 MXU operands (f32 accumulation) -> tolerance loosened accordingly.
    assert jnp.allclose(out, ref, atol=5e-2, rtol=5e-2), "mismatch vs reference"

    print("KERNEL_OK")
</pallas_src>

<mosaic_0001>
module attributes {stable_mosaic.version = 11 : i64} {
  func.func @_highway_cnn_kernel(%arg0: i32, %arg1: memref<2x16x32xf32, #tpu.memory_space<vmem>>, %arg2: memref<96x32xbf16, #tpu.memory_space<vmem>>, %arg3: memref<1x32xf32, #tpu.memory_space<vmem>>, %arg4: memref<32x16xbf16, #tpu.memory_space<vmem>>, %arg5: memref<32x1xf32, #tpu.memory_space<vmem>>, %arg6: memref<2x16x32xf32, #tpu.memory_space<vmem>>) attributes {dimension_semantics = [#tpu.dimension_semantics<parallel>], iteration_bounds = array<i64: 2>, scalar_prefetch = 0 : i64, scratch_operands = 0 : i64, tpu.core_type = #tpu.core_type<tc>, window_params = [{transform_indices = @transform_0, window_bounds = array<i64: 2, 16, 32>}, {pipeline_mode = #tpu.pipeline_mode<synchronous>, transform_indices = @transform_1, window_bounds = array<i64: 96, 32>}, {pipeline_mode = #tpu.pipeline_mode<synchronous>, transform_indices = @transform_2, window_bounds = array<i64: 1, 32>}, {pipeline_mode = #tpu.pipeline_mode<synchronous>, transform_indices = @transform_3, window_bounds = array<i64: 32, 16>}, {pipeline_mode = #tpu.pipeline_mode<synchronous>, transform_indices = @transform_4, window_bounds = array<i64: 32, 1>}, {transform_indices = @transform_5, window_bounds = array<i64: 2, 16, 32>}]} {
    %c0 = arith.constant 0 : index
    %c0_0 = arith.constant 0 : index
    %c0_1 = arith.constant 0 : index
    %0 = vector.load %arg1[%c0, %c0_0, %c0_1] : memref<2x16x32xf32, #tpu.memory_space<vmem>>, vector<2x16x32xf32>
    %cst = arith.constant 0.000000e+00 : f32
    %1 = vector.broadcast %cst : f32 to vector<2x1x32xf32>
    %2 = tpu.concatenate %1, %0, %1 in 1 : vector<2x1x32xf32>, vector<2x16x32xf32>, vector<2x1x32xf32> -> vector<2x18x32xf32>
    %3 = vector.extract_strided_slice %2 {offsets = [0, 0, 0], sizes = [2, 16, 32], strides = [1, 1, 1]} : vector<2x18x32xf32> to vector<2x16x32xf32>
    %4 = vector.extract_strided_slice %2 {offsets = [0, 1, 0], sizes = [2, 16, 32], strides = [1, 1, 1]} : vector<2x18x32xf32> to vector<2x16x32xf32>
    %5 = vector.extract_strided_slice %2 {offsets = [0, 2, 0], sizes = [2, 16, 32], strides = [1, 1, 1]} : vector<2x18x32xf32> to vector<2x16x32xf32>
    %6 = tpu.concatenate %3, %4, %5 in 2 : vector<2x16x32xf32>, vector<2x16x32xf32>, vector<2x16x32xf32> -> vector<2x16x96xf32>
    %7 = vector.shape_cast %6 : vector<2x16x96xf32> to vector<32x96xf32>
    %8 = arith.truncf %7 : vector<32x96xf32> to vector<32x96xbf16>
    %c0_2 = arith.constant 0 : index
    %c0_3 = arith.constant 0 : index
    %9 = vector.load %arg2[%c0_2, %c0_3] : memref<96x32xbf16, #tpu.memory_space<vmem>>, vector<96x32xbf16>
    %cst_4 = arith.constant dense<0.000000e+00> : vector<32x32xf32>
    %10 = tpu.matmul %8, %9, %cst_4 {dimension_numbers = #tpu.dot_dimension_numbers<[1], [0], [0], [1], [0, 0, 1, 1], [], []>} : vector<32x96xbf16>, vector<96x32xbf16>, vector<32x32xf32> -> vector<32x32xf32>
    %c0_5 = arith.constant 0 : index
    %c0_6 = arith.constant 0 : index
    %11 = vector.load %arg3[%c0_5, %c0_6] : memref<1x32xf32, #tpu.memory_space<vmem>>, vector<1x32xf32>
    %12 = vector.broadcast %11 : vector<1x32xf32> to vector<32x32xf32>
    %13 = arith.addf %10, %12 : vector<32x32xf32>
    %cst_7 = arith.constant 0.000000e+00 : f32
    %14 = vector.broadcast %cst_7 : f32 to vector<32x32xf32>
    %15 = arith.maximumf %13, %14 : vector<32x32xf32>
    %16 = vector.shape_cast %15 : vector<32x32xf32> to vector<2x16x32xf32>
    %c0_8 = arith.constant 0 : index
    %c0_9 = arith.constant 0 : index
    %17 = vector.load %arg4[%c0_8, %c0_9] : memref<32x16xbf16, #tpu.memory_space<vmem>>, vector<32x16xbf16>
    %c0_10 = arith.constant 0 : index
    %c0_11 = arith.constant 0 : index
    %18 = vector.load %arg5[%c0_10, %c0_11] : memref<32x1xf32, #tpu.memory_space<vmem>>, vector<32x1xf32>
    %19 = vector.extract_strided_slice %16 {offsets = [0, 0, 0], sizes = [1, 16, 32], strides = [1, 1, 1]} : vector<2x16x32xf32> to vector<1x16x32xf32>
    %20 = vector.shape_cast %19 : vector<1x16x32xf32> to vector<16x32xf32>
    %21 = arith.truncf %20 : vector<16x32xf32> to vector<16x32xbf16>
    %cst_12 = arith.constant dense<0.000000e+00> : vector<32x32xf32>
    %22 = tpu.matmul %17, %21, %cst_12 {dimension_numbers = #tpu.dot_dimension_numbers<[1], [0], [0], [1], [0, 0, 1, 1], [], []>} : vector<32x16xbf16>, vector<16x32xbf16>, vector<32x32xf32> -> vector<32x32xf32>
    %23 = vector.broadcast %18 : vector<32x1xf32> to vector<32x32xf32>
    %24 = arith.addf %22, %23 : vector<32x32xf32>
    %25 = vector.extract_strided_slice %24 {offsets = [0, 0], sizes = [16, 32], strides = [1, 1]} : vector<32x32xf32> to vector<16x32xf32>
    %26 = math.tanh %25 : vector<16x32xf32>
    %27 = vector.extract_strided_slice %24 {offsets = [16, 0], sizes = [16, 32], strides = [1, 1]} : vector<32x32xf32> to vector<16x32xf32>
    %28 = arith.negf %27 : vector<16x32xf32>
    %29 = math.exp %28 : vector<16x32xf32>
    %cst_13 = arith.constant 1.000000e+00 : f32
    %30 = vector.broadcast %cst_13 : f32 to vector<16x32xf32>
    %31 = arith.addf %30, %29 : vector<16x32xf32>
    %32 = arith.divf %30, %31 : vector<16x32xf32>
    %33 = arith.mulf %26, %32 : vector<16x32xf32>
    %cst_14 = arith.constant 1.000000e+00 : f32
    %34 = vector.broadcast %cst_14 : f32 to vector<16x32xf32>
    %35 = arith.subf %34, %32 : vector<16x32xf32>
    %36 = arith.mulf %20, %35 : vector<16x32xf32>
    %37 = arith.addf %33, %36 : vector<16x32xf32>
    %c0_15 = arith.constant 0 : index
    %c0_16 = arith.constant 0 : index
    %c0_17 = arith.constant 0 : index
    %38 = vector.load %arg6[%c0_15, %c0_16, %c0_17] : memref<2x16x32xf32, #tpu.memory_space<vmem>>, vector<1x16x32xf32>
    %39 = vector.shape_cast %38 : vector<1x16x32xf32> to vector<16x32xf32>
    %40 = vector.shape_cast %37 : vector<16x32xf32> to vector<1x16x32xf32>
    tpu.vector_store %arg6[%c0_15, %c0_16, %c0_17], %40 {strides = array<i32>} : memref<2x16x32xf32, #tpu.memory_space<vmem>>, vector<1x16x32xf32>,
    %41 = vector.extract_strided_slice %16 {offsets = [1, 0, 0], sizes = [1, 16, 32], strides = [1, 1, 1]} : vector<2x16x32xf32> to vector<1x16x32xf32>
    %42 = vector.shape_cast %41 : vector<1x16x32xf32> to vector<16x32xf32>
    %43 = arith.truncf %42 : vector<16x32xf32> to vector<16x32xbf16>
    %cst_18 = arith.constant dense<0.000000e+00> : vector<32x32xf32>
    %44 = tpu.matmul %17, %43, %cst_18 {dimension_numbers = #tpu.dot_dimension_numbers<[1], [0], [0], [1], [0, 0, 1, 1], [], []>} : vector<32x16xbf16>, vector<16x32xbf16>, vector<32x32xf32> -> vector<32x32xf32>
    %45 = vector.broadcast %18 : vector<32x1xf32> to vector<32x32xf32>
    %46 = arith.addf %44, %45 : vector<32x32xf32>
    %47 = vector.extract_strided_slice %46 {offsets = [0, 0], sizes = [16, 32], strides = [1, 1]} : vector<32x32xf32> to vector<16x32xf32>
    %48 = math.tanh %47 : vector<16x32xf32>
    %49 = vector.extract_strided_slice %46 {offsets = [16, 0], sizes = [16, 32], strides = [1, 1]} : vector<32x32xf32> to vector<16x32xf32>
    %50 = arith.negf %49 : vector<16x32xf32>
    %51 = math.exp %50 : vector<16x32xf32>
    %cst_19 = arith.constant 1.000000e+00 : f32
    %52 = vector.broadcast %cst_19 : f32 to vector<16x32xf32>
    %53 = arith.addf %52, %51 : vector<16x32xf32>
    %54 = arith.divf %52, %53 : vector<16x32xf32>
    %55 = arith.mulf %48, %54 : vector<16x32xf32>
    %cst_20 = arith.constant 1.000000e+00 : f32
    %56 = vector.broadcast %cst_20 : f32 to vector<16x32xf32>
    %57 = arith.subf %56, %54 : vector<16x32xf32>
    %58 = arith.mulf %42, %57 : vector<16x32xf32>
    %59 = arith.addf %55, %58 : vector<16x32xf32>
    %c1 = arith.constant 1 : index
    %c0_21 = arith.constant 0 : index
    %c0_22 = arith.constant 0 : index
    %60 = vector.load %arg6[%c1, %c0_21, %c0_22] : memref<2x16x32xf32, #tpu.memory_space<vmem>>, vector<1x16x32xf32>
    %61 = vector.shape_cast %60 : vector<1x16x32xf32> to vector<16x32xf32>
    %62 = vector.shape_cast %59 : vector<16x32xf32> to vector<1x16x32xf32>
    tpu.vector_store %arg6[%c1, %c0_21, %c0_22], %62 {strides = array<i32>} : memref<2x16x32xf32, #tpu.memory_space<vmem>>, vector<1x16x32xf32>,
    return
  }
  func.func @transform_0(%arg0: i32) -> (i32, i32, i32) {
    %c0_i32 = arith.constant 0 : i32
    %c0_i32_0 = arith.constant 0 : i32
    %c0_i32_1 = arith.constant 0 : i32
    return %arg0, %c0_i32, %c0_i32_0 : i32, i32, i32
  }
  func.func @transform_1(%arg0: i32) -> (i32, i32) {
    %c0_i32 = arith.constant 0 : i32
    %c0_i32_0 = arith.constant 0 : i32
    %c0_i32_1 = arith.constant 0 : i32
    return %c0_i32, %c0_i32_0 : i32, i32
  }
  func.func @transform_2(%arg0: i32) -> (i32, i32) {
    %c0_i32 = arith.constant 0 : i32
    %c0_i32_0 = arith.constant 0 : i32
    %c0_i32_1 = arith.constant 0 : i32
    return %c0_i32, %c0_i32_0 : i32, i32
  }
  func.func @transform_3(%arg0: i32) -> (i32, i32) {
    %c0_i32 = arith.constant 0 : i32
    %c0_i32_0 = arith.constant 0 : i32
    %c0_i32_1 = arith.constant 0 : i32
    return %c0_i32, %c0_i32_0 : i32, i32
  }
  func.func @transform_4(%arg0: i32) -> (i32, i32) {
    %c0_i32 = arith.constant 0 : i32
    %c0_i32_0 = arith.constant 0 : i32
    %c0_i32_1 = arith.constant 0 : i32
    return %c0_i32, %c0_i32_0 : i32, i32
  }
  func.func @transform_5(%arg0: i32) -> (i32, i32, i32) {
    %c0_i32 = arith.constant 0 : i32
    %c0_i32_0 = arith.constant 0 : i32
    %c0_i32_1 = arith.constant 0 : i32
    return %arg0, %c0_i32, %c0_i32_0 : i32, i32, i32
  }
}

</mosaic_0001>

<llo_original>
// kernel: fwd.1
$region0: #{fwd.1}
  #allocation0 [shape = 'u32[]', space=smem, size = 0x4, offset = 0x4, fixed_abs, tag = 'smem constant byte address 0x4 - core index']
  #allocation1 [shape = 'u32[144,128]{1,0:T(1,128)}', space=vmem, size = 0x12000, scoped, tag = 'internal scratch']
  %s0 = inlined_call_operand.hbm [shape: f32[4,16,32], index: 0, kind: input, shape index: {}]
  %s1 = inlined_call_operand.hbm [shape: bf16[96,32], index: 1, kind: input, shape index: {}]
  %s2 = inlined_call_operand.vmem [shape: f32[1,32], index: 2, kind: input, shape index: {}]
  %s3 = inlined_call_operand.vmem [shape: bf16[32,16], index: 3, kind: input, shape index: {}]
  %s4 = inlined_call_operand.hbm [shape: f32[32,1], index: 4, kind: input, shape index: {}]
  %s5 = inlined_call_operand.hbm [shape: f32[4,16,32], index: 5, kind: output, shape index: {}]
  %s6 = sld [smem:[#allocation0]]
  $region65: #{fwd.1} parent=0
    _
  %s8 = ssub.s32 1, %s6
  %s9 = scalar_select 0, %s8, %s6
  $region1: #{fwd.1} parent=0
    #allocation2 [shape = 'u8[32768]{0}', space=vmem, size = 0x8000, scoped, tag = 'input window, operand 0']
    #allocation3 [shape = 's32[2]{0}', space=sflag, size = 0x8, scoped, tag = 'scoped memory for fwd.1']
    #allocation4 [shape = 's32[2]{0}', space=sflag, size = 0x8, scoped, tag = 'scoped memory for fwd.1']
    #allocation5 [shape = 'u8[24576]{0}', space=vmem, size = 0x6000, scoped, tag = 'input window, operand 1, single buffered']
    #allocation6 [shape = 's32[1]{0}', space=sflag, size = 0x4, scoped, tag = 'scoped memory for fwd.1']
    #allocation7 [shape = 'u8[16384]{0}', space=vmem, size = 0x4000, scoped, tag = 'input window, operand 4, single buffered']
    #allocation8 [shape = 'u8[32768]{0}', space=vmem, size = 0x8000, scoped, tag = 'output window, operand 0']
    %10 = vsyncpa [#allocation3], 0
    %s11 = scalar_lea.sflag [#allocation3], 1
    %12 = vsyncpa %s11, 0
    %13 = vsyncpa [#allocation6], 0
    %14 = vsyncpa [#allocation4], 0
    %s15 = scalar_lea.sflag [#allocation4], 1
    %16 = vsyncpa %s15, 0
    loop: start=0, step=1, limit=4
    $region2: #{fwd.1} parent=1 // loop_pre_header
      _
    $region3: #{fwd.1} parent=1 // loop_header
      %s18 = sphi 0, %s22
      %p19 = scmp.ge.s32.totalorder %s18, 4
      %s28 = sphi 0, %s30
      %s31 = sphi 0, %s28
      %s32 = sphi 0, %s31
      %s48 = sphi 0, %s32
      %s52 = sphi 0, %s52
      %s54 = sphi 0, %s52
      %s55 = sphi 0, %s54
      %s69 = sphi 0, %s55
      %s73 = sphi 0, %s73
      %s75 = sphi 0, %s73
      %s76 = sphi 0, %s75
      %s90 = sphi 0, %s76
      %s94 = sphi 0, %s94
      %s96 = sphi 0, %s94
      %s97 = sphi 0, %s96
      %s111 = sphi 0, %s97
      %s115 = sphi 0, %s115
      %s117 = sphi 0, %s115
      %s118 = sphi 0, %s117
      %s132 = sphi 0, %s118
      %s138 = sphi 0, %s140
      %s141 = sphi 0, %s138
      %s142 = sphi 0, %s141
      %s158 = sphi 0, %s142
    $region4: #{fwd.1} parent=1 // loop_header_branch
      %21 = sbr.rel (%p19) target = $region8
    $region5: #{fwd.1} parent=1 // loop_body
      %s23 = ssub.s32 %s18, 1
      %s24 = ssub.s32 %s18, 2
      %s25 = sadd.s32 %s18, 1
      %s26 = ssub.s32 %s18, %s25
      %p27 = scmp.eq.s32.totalorder %s26, 0
      %s29 = sadd.s32 %s28, 1
      %s30 = scalar_select %p27, %s28, %s29
      %p33 = pneg %p27
      %p34 = scmp.eq.s32.totalorder %s18, 1
      %p35 = por %p33, %p34
      %p36 = scmp.ne.s32.totalorder %s28, %s31
      %p37 = scmp.eq.s32.totalorder %s18, 0
      %p38 = por %p36, %p37
      %p39 = scmp.ne.s32.totalorder %s28, %s31
      %p40 = scmp.eq.s32.totalorder %s23, 1
      %p41 = por %p39, %p40
      %p42 = scmp.ne.s32.totalorder %s31, %s32
      %p43 = scmp.eq.s32.totalorder %s23, 0
      %p44 = por %p42, %p43
      %p45 = scmp.ne.s32.totalorder %s31, %s32
      %p46 = scmp.eq.s32.totalorder %s24, 1
      %p47 = por %p45, %p46
      %p49 = scmp.ne.s32.totalorder %s32, %s48
      %p50 = scmp.eq.s32.totalorder %s24, 0
      %p51 = por %p49, %p50
      %s53 = sadd.s32 %s52, 1
      %p56 = scmp.eq.s32.totalorder %s18, 1
      %p57 = scmp.ne.s32.totalorder %s52, %s54
      %p58 = scmp.eq.s32.totalorder %s18, 0
      %p59 = por %p57, %p58
      %p60 = scmp.ne.s32.totalorder %s52, %s54
      %p61 = scmp.eq.s32.totalorder %s23, 1
      %p62 = por %p60, %p61
      %p63 = scmp.ne.s32.totalorder %s54, %s55
      %p64 = scmp.eq.s32.totalorder %s23, 0
      %p65 = por %p63, %p64
      %p66 = scmp.ne.s32.totalorder %s54, %s55
      %p67 = scmp.eq.s32.totalorder %s24, 1
      %p68 = por %p66, %p67
      %p70 = scmp.ne.s32.totalorder %s55, %s69
      %p71 = scmp.eq.s32.totalorder %s24, 0
      %p72 = por %p70, %p71
      %s74 = sadd.s32 %s73, 1
      %p77 = scmp.eq.s32.totalorder %s18, 1
      %p78 = scmp.ne.s32.totalorder %s73, %s75
      %p79 = scmp.eq.s32.totalorder %s18, 0
      %p80 = por %p78, %p79
      %p81 = scmp.ne.s32.totalorder %s73, %s75
      %p82 = scmp.eq.s32.totalorder %s23, 1
      %p83 = por %p81, %p82
      %p84 = scmp.ne.s32.totalorder %s75, %s76
      %p85 = scmp.eq.s32.totalorder %s23, 0
      %p86 = por %p84, %p85
      %p87 = scmp.ne.s32.totalorder %s75, %s76
      %p88 = scmp.eq.s32.totalorder %s24, 1
      %p89 = por %p87, %p88
      %p91 = scmp.ne.s32.totalorder %s76, %s90
      %p92 = scmp.eq.s32.totalorder %s24, 0
      %p93 = por %p91, %p92
      %s95 = sadd.s32 %s94, 1
      %p98 = scmp.eq.s32.totalorder %s18, 1
      %p99 = scmp.ne.s32.totalorder %s94, %s96
      %p100 = scmp.eq.s32.totalorder %s18, 0
      %p101 = por %p99, %p100
      %p102 = scmp.ne.s32.totalorder %s94, %s96
      %p103 = scmp.eq.s32.totalorder %s23, 1
      %p104 = por %p102, %p103
      %p105 = scmp.ne.s32.totalorder %s96, %s97
      %p106 = scmp.eq.s32.totalorder %s23, 0
      %p107 = por %p105, %p106
      %p108 = scmp.ne.s32.totalorder %s96, %s97
      %p109 = scmp.eq.s32.totalorder %s24, 1
      %p110 = por %p108, %p109
      %p112 = scmp.ne.s32.totalorder %s97, %s111
      %p113 = scmp.eq.s32.totalorder %s24, 0
      %p114 = por %p112, %p113
      %s116 = sadd.s32 %s115, 1
      %p119 = scmp.eq.s32.totalorder %s18, 1
      %p120 = scmp.ne.s32.totalorder %s115, %s117
      %p121 = scmp.eq.s32.totalorder %s18, 0
      %p122 = por %p120, %p121
      %p123 = scmp.ne.s32.totalorder %s115, %s117
      %p124 = scmp.eq.s32.totalorder %s23, 1
      %p125 = por %p123, %p124
      %p126 = scmp.ne.s32.totalorder %s117, %s118
      %p127 = scmp.eq.s32.totalorder %s23, 0
      %p128 = por %p126, %p127
      %p129 = scmp.ne.s32.totalorder %s117, %s118
      %p130 = scmp.eq.s32.totalorder %s24, 1
      %p131 = por %p129, %p130
      %p133 = scmp.ne.s32.totalorder %s118, %s132
      %p134 = scmp.eq.s32.totalorder %s24, 0
      %p135 = por %p133, %p134
      %s136 = ssub.s32 %s18, %s25
      %p137 = scmp.eq.s32.totalorder %s136, 0
      %s139 = sadd.s32 %s138, 1
      %s140 = scalar_select %p137, %s138, %s139
      %p143 = pneg %p137
      %p144 = scmp.eq.s32.totalorder %s18, 1
      %p145 = por %p143, %p144
      %p146 = scmp.ne.s32.totalorder %s138, %s141
      %p147 = scmp.eq.s32.totalorder %s18, 0
      %p148 = por %p146, %p147
      %p149 = scmp.ne.s32.totalorder %s138, %s141
      %p150 = scmp.eq.s32.totalorder %s23, 1
      %p151 = por %p149, %p150
      %p152 = scmp.ne.s32.totalorder %s141, %s142
      %p153 = scmp.eq.s32.totalorder %s23, 0
      %p154 = por %p152, %p153
      %p155 = scmp.ne.s32.totalorder %s141, %s142
      %p156 = scmp.eq.s32.totalorder %s24, 1
      %p157 = por %p155, %p156
      %p159 = scmp.ne.s32.totalorder %s142, %s158
      %p160 = scmp.eq.s32.totalorder %s24, 0
      %p161 = por %p159, %p160
      %p162 = scmp.le.s32.totalorder 1, %s18
      %p163 = scmp.lt.s32.totalorder %s18, 3
      %p164 = pnand %p162, %p163
      %p165 = pneg %p164
      // Predicated region
      $region9: #{fwd.1} parent=5 // pred_check
        _
      $region10: #{fwd.1} parent=5 // pred_check_branch
        %167 = sbr.rel (%p164) target = $region12
      $region11: #{fwd.1} parent=5 // pred_region
        %s168 = ssub.s32 %s18, 1
        // Predicated region
        $region13: #{fwd.1} parent=11 // pred_check
          %p169 = pneg %p65
        $region14: #{fwd.1} parent=11 // pred_check_branch
          %171 = sbr.rel (%p169) target = $region16
        $region15: #{fwd.1} parent=11 // pred_region
          %s173 = ssub.s32 768, 768
          %174 = vsyncadd [#allocation6], %s173
          %s175 = sshll.u32 [#allocation5], 4
          %s176 = int_to_ptr.vmem [resolvable:$true] %s175
          %181 = dma.hbm_to_vmem [thread:$0]  %s1, 768, %s176, [#allocation6], 64, 64, 4
        $region16: #{fwd.1} parent=11 // pred_fallthru
          _
        // Predicated region
        $region17: #{fwd.1} parent=11 // pred_check
          %p182 = pneg %p86
        $region18: #{fwd.1} parent=11 // pred_check_branch
          %184 = sbr.rel (%p182) target = $region20
        $region19: #{fwd.1} parent=11 // pred_region
          _
        $region20: #{fwd.1} parent=11 // pred_fallthru
          _
        // Predicated region
        $region21: #{fwd.1} parent=11 // pred_check
          %p185 = pneg %p107
        $region22: #{fwd.1} parent=11 // pred_check_branch
          %187 = sbr.rel (%p185) target = $region24
        $region23: #{fwd.1} parent=11 // pred_region
          _
        $region24: #{fwd.1} parent=11 // pred_fallthru
          _
        // Predicated region
        $region25: #{fwd.1} parent=11 // pred_check
          %p188 = pneg %p128
        $region26: #{fwd.1} parent=11 // pred_check_branch
          %190 = sbr.rel (%p188) target = $region28
        $region27: #{fwd.1} parent=11 // pred_region
          %s192 = ssub.s32 512, 512
          %193 = vsyncadd [#allocation6], %s192
          %s194 = sshll.u32 [#allocation7], 4
          %s195 = int_to_ptr.vmem [resolvable:$true] %s194
          %200 = dma.hbm_to_vmem [thread:$0]  %s4, 512, %s195, [#allocation6], 128, 128, 8
        $region28: #{fwd.1} parent=11 // pred_fallthru
          _
      $region12: #{fwd.1} parent=5 // pred_fallthru
        _
      %p201 = scmp.lt.s32.totalorder %s18, 2
      // Predicated region
      $region29: #{fwd.1} parent=5 // pred_check
        %p202 = pneg %p201
      $region30: #{fwd.1} parent=5 // pred_check_branch
        %204 = sbr.rel (%p202) target = $region32
      $region31: #{fwd.1} parent=5 // pred_region
        // Predicated region
        $region33: #{fwd.1} parent=31 // pred_check
          %p205 = pneg %p38
        $region34: #{fwd.1} parent=31 // pred_check_branch
          %207 = sbr.rel (%p205) target = $region36
        $region35: #{fwd.1} parent=31 // pred_region
          %s208 = sand.u32 %s28, 1
          %s209 = scalar_lea.sflag [#allocation3], %s208
          %s210 = sand.u32 %s28, 1
          %s211 = smul.addr %s210, 32
          %s212 = scalar_lea.vmem [#allocation2], %s211
          %s213 = smul.u32 2, %s18
          %s215 = ssub.s32 512, 512
          %216 = vsyncadd %s209, %s215
          %s217 = smul.addr %s213, 2
          %s218 = smul.addr %s217, 128
          %s219 = scalar_lea.hbm %s0, %s218
          %s220 = sshll.u32 %s212, 4
          %s221 = int_to_ptr.vmem [resolvable:$true] %s220
          %226 = dma.hbm_to_vmem [thread:$0]  %s219, 512, %s221, %s209, 128, 128, 8
        $region36: #{fwd.1} parent=31 // pred_fallthru
          _
      $region32: #{fwd.1} parent=5 // pred_fallthru
        _
      %p227 = scmp.le.s32.totalorder 1, %s18
      %p228 = scmp.lt.s32.totalorder %s18, 3
      %p229 = pnand %p227, %p228
      %p230 = pneg %p229
      // Predicated region
      $region37: #{fwd.1} parent=5 // pred_check
        _
      $region38: #{fwd.1} parent=5 // pred_check_branch
        %232 = sbr.rel (%p229) target = $region40
      $region39: #{fwd.1} parent=5 // pred_region
        %s233 = ssub.s32 %s18, 1
        %s234 = sand.u32 %s31, 1
        %s235 = scalar_lea.sflag [#allocation3], %s234
        %s236 = sand.u32 %s31, 1
        %s237 = smul.addr %s236, 32
        %s238 = scalar_lea.vmem [#allocation2], %s237
        // Predicated region
        $region41: #{fwd.1} parent=39 // pred_check
          %p239 = pneg %p44
        $region42: #{fwd.1} parent=39 // pred_check_branch
          %241 = sbr.rel (%p239) target = $region44
        $region43: #{fwd.1} parent=39 // pred_region
          %242 = dma.done %s235, 512
        $region44: #{fwd.1} parent=39 // pred_fallthru
          _
        // Predicated region
        $region45: #{fwd.1} parent=39 // pred_check
          %p243 = pneg %p65
        $region46: #{fwd.1} parent=39 // pred_check_branch
          %245 = sbr.rel (%p243) target = $region48
        $region47: #{fwd.1} parent=39 // pred_region
          %246 = dma.done [#allocation6], 768
        $region48: #{fwd.1} parent=39 // pred_fallthru
          _
        // Predicated region
        $region49: #{fwd.1} parent=39 // pred_check
          %p247 = pneg %p128
        $region50: #{fwd.1} parent=39 // pred_check_branch
          %249 = sbr.rel (%p247) target = $region52
        $region51: #{fwd.1} parent=39 // pred_region
          %250 = dma.done [#allocation6], 512
        $region52: #{fwd.1} parent=39 // pred_fallthru
          _
        %s251 = sand.u32 %s31, 1
        %s252 = scalar_lea.sflag [#allocation3], %s251
        %s253 = sand.u32 %s31, 1
        %s254 = smul.addr %s253, 32
        %s255 = scalar_lea.vmem [#allocation2], %s254
        %p256 = pneg %p44
        %p257 = pneg %p41
        %p258 = pneg %p65
        %p259 = pneg %p62
        %p260 = pneg %p86
        %p261 = pneg %p83
        %p262 = pneg %p107
        %p263 = pneg %p104
        %p264 = pneg %p128
        %p265 = pneg %p125
        %p266 = pneg %p154
        %p267 = pneg %p151
        %s268 = sand.u32 %s141, 1
        %s269 = scalar_lea.sflag [#allocation4], %s268
        %s270 = sand.u32 %s141, 1
        %s271 = smul.addr %s270, 32
        %s272 = scalar_lea.vmem [#allocation8], %s271
        %s273 = smul.u32 2, %s23
        %s274 = smul.u32 2, %s23
        %v276 = vld [vmem:[%s238] sm:$0xff]
        %v277 = vld [vmem:[%s238 + $0x8] sm:$0xff]
        %v278 = vld [vmem:[%s238 + $0x10] sm:$0xff]
        %v279 = vld [vmem:[%s238 + $0x18] sm:$0xff]
        %vm284 = vcmask 1040384
        %v285 = vrot.slane %v276, 7
        %v286 = vrot.slane %v277, 7
        %v287 = vsel %vm284, %v285, %v286
        %v288 = vrot.slane %v278, 7
        %v289 = vrot.slane %v279, 7
        %v290 = vsel %vm284, %v288, %v289
        %v297 = vsel %vm284, 0.0, %v285
        %v298 = vsel %vm284, 0.0, %v288
        %v299 = vsel %vm284, %v286, 0.0
        %v300 = vsel %vm284, %v289, 0.0
        %vm305 = vcmask 1046528
        %v306 = vrot.slane %v297, 1
        %v307 = vrot.slane %v287, 1
        %v308 = vsel %vm305, %v306, %v307
        %v309 = vrot.slane %v299, 1
        %v310 = vsel %vm305, %v307, %v309
        %v311 = vrot.slane %v298, 1
        %v312 = vrot.slane %v290, 1
        %v313 = vsel %vm305, %v311, %v312
        %v314 = vrot.slane %v300, 1
        %v315 = vsel %vm305, %v312, %v314
        %316 = vrot.lane.b32.xlu0 %v308, 32
        %v317 = vpop.permute.xlu0 %316
        %318 = vrot.lane.b32.xlu0 %v310, 32
        %v319 = vpop.permute.xlu0 %318
        %320 = vrot.lane.b32.xlu0 %v313, 32
        %v321 = vpop.permute.xlu0 %320
        %322 = vrot.lane.b32.xlu0 %v315, 32
        %v323 = vpop.permute.xlu0 %322
        %vm328 = vcmask 1045504
        %v329 = vrot.slane %v297, 2
        %v330 = vrot.slane %v287, 2
        %v331 = vsel %vm328, %v329, %v330
        %v332 = vrot.slane %v299, 2
        %v333 = vsel %vm328, %v330, %v332
        %v334 = vrot.slane %v298, 2
        %v335 = vrot.slane %v290, 2
        %v336 = vsel %vm328, %v334, %v335
        %v337 = vrot.slane %v300, 2
        %v338 = vsel %vm328, %v335, %v337
        %339 = vrot.lane.b32.xlu0 %v331, 64
        %v340 = vpop.permute.xlu0 %339
        %341 = vrot.lane.b32.xlu0 %v333, 64
        %v342 = vpop.permute.xlu0 %341
        %343 = vrot.lane.b32.xlu0 %v336, 64
        %v344 = vpop.permute.xlu0 %343
        %345 = vrot.lane.b32.xlu0 %v338, 64
        %v346 = vpop.permute.xlu0 %345
        %vm351 = vcmask 261120
        %v352 = vsel %vm351, %v297, %v317
        %v353 = vsel %vm351, %v287, %v319
        %v354 = vsel %vm351, %v298, %v321
        %v355 = vsel %vm351, %v290, %v323
        %vm356 = vcmask 523264
        %v357 = vsel %vm356, %v352, %v340
        %v358 = vsel %vm356, %v353, %v342
        %v359 = vsel %vm356, %v354, %v344
        %v360 = vsel %vm356, %v355, %v346
        %v361 = vpack.c.bf16 %v358, %v357
        %v362 = vpack.c.bf16 %v360, %v359
        %v363 = vld [vmem:[#allocation5] sm:$0xf]
        %v364 = vld [vmem:[#allocation5 + $0x4] sm:$0xf]
        %v365 = vld [vmem:[#allocation5 + $0x8] sm:$0xf]
        %v366 = vld [vmem:[#allocation5 + $0xc] sm:$0xf]
        %v367 = vld [vmem:[#allocation5 + $0x10] sm:$0xf]
        %v368 = vld [vmem:[#allocation5 + $0x14] sm:$0xf]
        %v369 = vld [vmem:[#allocation5 + $0x18] sm:$0xf]
        %v370 = vld [vmem:[#allocation5 + $0x1c] sm:$0xf]
        %v371 = vld [vmem:[#allocation5 + $0x20] sm:$0xf]
        %v372 = vld [vmem:[#allocation5 + $0x24] sm:$0xf]
        %v373 = vld [vmem:[#allocation5 + $0x28] sm:$0xf]
        %v374 = vld [vmem:[#allocation5 + $0x2c] sm:$0xf]
        %v375 = vld [vmem:[%s2] sm:$0x1]
        %v377 = vlaneseq
        %v378 = vshrl.u32 %v377, 7
        %v379 = vsub.s32 0, %v378
        %v380 = vrot.slane %v375, %v379
        %v394 = vunpack.c.l.b16 %v363
        %v395 = vunpack.c.l.b16 %v364
        %v396 = vunpack.c.l.b16 %v365
        %v397 = vunpack.c.l.b16 %v366
        %v398 = vunpack.c.l.b16 %v367
        %v399 = vunpack.c.l.b16 %v368
        %v400 = vunpack.c.l.b16 %v369
        %v401 = vunpack.c.l.b16 %v370
        %v402 = vunpack.c.l.b16 %v371
        %v403 = vunpack.c.l.b16 %v372
        %v404 = vunpack.c.l.b16 %v373
        %v405 = vunpack.c.l.b16 %v374
        %v406 = vpack.c.b16 %v395, %v394
        %v407 = vpack.c.b16 %v397, %v396
        %v408 = vpack.c.b16 %v399, %v398
        %v409 = vpack.c.b16 %v401, %v400
        %v410 = vpack.c.b16 %v403, %v402
        %v411 = vpack.c.b16 %v405, %v404
        %vm418 = vcmask 785408
        %v420 = vsel %vm418, %v361, 0
        %v423 = vsel %vm418, %v362, 0
        %425 = vmatprep.subr.bf16.mxu0 0
        %426 = vmatpush1.bf16.msra.mxu0 %v406
        %427 = vmatprep.subr.bf16.mxu0 0
        %428 = vmatpush1.bf16.msra.mxu0 %v407
        %429 = vmatprep.subr.bf16.mxu0 0
        %430 = vmatpush1.bf16.msra.mxu0 %v408
        %431 = vmatprep.subr.bf16.mxu0 0
        %432 = vmatpush1.bf16.msra.mxu0 %v409
        %433 = vmatprep.subr.bf16.mxu0 0
        %434 = vmatpush1.bf16.msra.mxu0 %v410
        %435 = vmatprep.subr.bf16.mxu0 0
        %436 = vmatpush1.bf16.msra.mxu0 %v411
        %437 = vmatprep.subr.bf16.mxu0 0
        %438 = vmatpush1.bf16.msra.mxu0 0
        %439 = vmatprep.subr.bf16.mxu0 0
        %440 = vmatpush1.bf16.msra.mxu0 0
        %441 = vmatprep.subr.bf16.mxu0 0
        %442 = vmatpush1.bf16.msra.mxu0 0
        %443 = vmatprep.subr.bf16.mxu0 0
        %444 = vmatpush1.bf16.msra.mxu0 0
        %445 = vmatprep.subr.bf16.mxu0 0
        %446 = vmatpush1.bf16.msra.mxu0 0
        %447 = vmatprep.subr.bf16.mxu0 0
        %448 = vmatpush1.bf16.msra.mxu0 0
        %449 = vmatprep.subr.bf16.mxu0 0
        %450 = vmatpush1.bf16.msra.mxu0 0
        %451 = vmatprep.subr.bf16.mxu0 0
        %452 = vmatpush1.bf16.msra.mxu0 0
        %453 = vmatprep.subr.bf16.mxu0 0
        %454 = vmatpush1.bf16.msra.mxu0 0
        %455 = vmatprep.subr.bf16.mxu0 0
        %456 = vmatpush1.bf16.msra.mxu0 0
        %457 = vmatprep.mubr.bf16.mxu0 0
        %458 = vmatmul.mubr.bf16.gmra.mrb[0].mxu0 %v420
        %v459 = vpop.f32.mrb[0].mxu0
        %v460 = vadd.f32 %v380, %v459
        %v461 = vpop.f32.mrb[0].mxu0
        %v462 = vpop.f32.mrb[0].mxu0
        %v463 = vadd.f32 %v380, %v462
        %v464 = vpop.f32.mrb[0].mxu0
        %465 = vmatprep.mubr.bf16.mxu0 0
        %466 = vmatmul.mubr.bf16.gmra.mrb[0].mxu0 %v423
        %v467 = vpop.f32.mrb[0].mxu0
        %v468 = vadd.f32 %v380, %v467
        %v469 = vpop.f32.mrb[0].mxu0
        %v470 = vpop.f32.mrb[0].mxu0
        %v471 = vadd.f32 %v380, %v470
        %v472 = vpop.f32.mrb[0].mxu0
        %473 = vdwg.mxu0
        %v474 = vmax.f32 %v460, 0.0
        %v475 = vmax.f32 %v463, 0.0
        %v476 = vmax.f32 %v468, 0.0
        %v477 = vmax.f32 %v471, 0.0
        %v478 = vld [vmem:[%s3] sm:$0xf]
        %v479 = vld [vmem:[%s3 + $0x4] sm:$0xf]
        %v480 = vld [vmem:[%s3 + $0x8] sm:$0xf]
        %v481 = vld [vmem:[%s3 + $0xc] sm:$0xf]
        %v482 = vld [vmem:[#allocation7] sm:$0xff]
        %v483 = vld [vmem:[#allocation7 + $0x8] sm:$0xff]
        %v484 = vld [vmem:[#allocation7 + $0x10] sm:$0xff]
        %v485 = vld [vmem:[#allocation7 + $0x18] sm:$0xff]
        %v486 = vpack.c.bf16 %v475, %v474
        %488 = vset.pattern.permute.xlu0 0
        %489 = vperm.xlu0 %488, %v482
        %v490 = vpop.permute.xlu0 %489
        %493 = vset.pattern.permute.xlu0 0
        %494 = vperm.xlu0 %493, %v483
        %v495 = vpop.permute.xlu0 %494
        %498 = vset.pattern.permute.xlu0 0
        %499 = vperm.xlu0 %498, %v484
        %v500 = vpop.permute.xlu0 %499
        %503 = vset.pattern.permute.xlu0 0
        %504 = vperm.xlu0 %503, %v485
        %v505 = vpop.permute.xlu0 %504
        %v511 = vunpack.c.l.b16 %v478
        %v512 = vunpack.c.l.b16 %v479
        %v513 = vunpack.c.l.b16 %v480
        %v514 = vunpack.c.l.b16 %v481
        %v515 = vpack.c.b16 %v512, %v511
        %v516 = vpack.c.b16 %v514, %v513
        %vm517 = vcmask 130048
        %v519 = vsel %vm517, %v515, 0
        %v522 = vsel %vm517, %v516, 0
        %524 = vmatprep.subr.bf16.mxu0 0
        %525 = vmatpush1.bf16.msra.mxu0 %v486
        %526 = vmatprep.subr.bf16.mxu0 0
        %527 = vmatpush1.bf16.msra.mxu0 0
        %528 = vmatprep.subr.bf16.mxu0 0
        %529 = vmatpush1.bf16.msra.mxu0 0
        %530 = vmatprep.subr.bf16.mxu0 0
        %531 = vmatpush1.bf16.msra.mxu0 0
        %532 = vmatprep.subr.bf16.mxu0 0
        %533 = vmatpush1.bf16.msra.mxu0 0
        %534 = vmatprep.subr.bf16.mxu0 0
        %535 = vmatpush1.bf16.msra.mxu0 0
        %536 = vmatprep.subr.bf16.mxu0 0
        %537 = vmatpush1.bf16.msra.mxu0 0
        %538 = vmatprep.subr.bf16.mxu0 0
        %539 = vmatpush1.bf16.msra.mxu0 0
        %540 = vmatprep.subr.bf16.mxu0 0
        %541 = vmatpush1.bf16.msra.mxu0 0
        %542 = vmatprep.subr.bf16.mxu0 0
        %543 = vmatpush1.bf16.msra.mxu0 0
        %544 = vmatprep.subr.bf16.mxu0 0
        %545 = vmatpush1.bf16.msra.mxu0 0
        %546 = vmatprep.subr.bf16.mxu0 0
        %547 = vmatpush1.bf16.msra.mxu0 0
        %548 = vmatprep.subr.bf16.mxu0 0
        %549 = vmatpush1.bf16.msra.mxu0 0
        %550 = vmatprep.subr.bf16.mxu0 0
        %551 = vmatpush1.bf16.msra.mxu0 0
        %552 = vmatprep.subr.bf16.mxu0 0
        %553 = vmatpush1.bf16.msra.mxu0 0
        %554 = vmatprep.subr.bf16.mxu0 0
        %555 = vmatpush1.bf16.msra.mxu0 0
        %556 = vmatprep.mubr.bf16.mxu0 0
        %557 = vmatmul.mubr.bf16.gmra.mrb[0].mxu0 %v519
        %v558 = vpop.f32.mrb[0].mxu0
        %v559 = vadd.f32 %v490, %v558
        %v560 = vpop.f32.mrb[0].mxu0
        %v561 = vpop.f32.mrb[0].mxu0
        %v562 = vadd.f32 %v495, %v561
        %v563 = vpop.f32.mrb[0].mxu0
        %564 = vmatprep.mubr.bf16.mxu0 0
        %565 = vmatmul.mubr.bf16.gmra.mrb[0].mxu0 %v522
        %v566 = vpop.f32.mrb[0].mxu0
        %v567 = vadd.f32 %v500, %v566
        %v568 = vpop.f32.mrb[0].mxu0
        %v569 = vpop.f32.mrb[0].mxu0
        %v570 = vadd.f32 %v505, %v569
        %v571 = vpop.f32.mrb[0].mxu0
        %572 = vdwg.mxu0
        %v573 = vtanh.pop %v559
        %v574 = vtanh.pop %v562
        %v575 = vxor.u32 %v567, 2147483648
        %v576 = vxor.u32 %v570, 2147483648
        %v577 = vmul.f32 %v575, 1.442695
        %v578 = vpow.pop %v577
        %v579 = vmul.f32 %v576, 1.442695
        %v580 = vpow.pop %v579
        %v581 = vadd.f32 %v578, 1.0
        %v582 = vadd.f32 %v580, 1.0
        %v583 = vrcp.pop %v581
        %v584 = vmul.f32 1.0, %v583
        %v585 = vrcp.pop %v582
        %v586 = vmul.f32 1.0, %v585
        %v587 = vmul.f32 %v573, %v584
        %v588 = vmul.f32 %v574, %v586
        %v589 = vsub.f32 1.0, %v584
        %v590 = vsub.f32 1.0, %v586
        %v591 = vmul.f32 %v474, %v589
        %v592 = vmul.f32 %v475, %v590
        %v593 = vadd.f32 %v587, %v591
        %v594 = vadd.f32 %v588, %v592
        %595 = vst.msk [vmem:[%s272] sm:$0xff] %vm351, %v593
        %596 = vst.msk [vmem:[%s272 + $0x8] sm:$0xff] %vm351, %v594
        %v597 = vpack.c.bf16 %v477, %v476
        %598 = vmatprep.subr.bf16.mxu0 0
        %599 = vmatpush1.bf16.msra.mxu0 %v597
        %600 = vmatprep.subr.bf16.mxu0 0
        %601 = vmatpush1.bf16.msra.mxu0 0
        %602 = vmatprep.subr.bf16.mxu0 0
        %603 = vmatpush1.bf16.msra.mxu0 0
        %604 = vmatprep.subr.bf16.mxu0 0
        %605 = vmatpush1.bf16.msra.mxu0 0
        %606 = vmatprep.subr.bf16.mxu0 0
        %607 = vmatpush1.bf16.msra.mxu0 0
        %608 = vmatprep.subr.bf16.mxu0 0
        %609 = vmatpush1.bf16.msra.mxu0 0
        %610 = vmatprep.subr.bf16.mxu0 0
        %611 = vmatpush1.bf16.msra.mxu0 0
        %612 = vmatprep.subr.bf16.mxu0 0
        %613 = vmatpush1.bf16.msra.mxu0 0
        %614 = vmatprep.subr.bf16.mxu0 0
        %615 = vmatpush1.bf16.msra.mxu0 0
        %616 = vmatprep.subr.bf16.mxu0 0
        %617 = vmatpush1.bf16.msra.mxu0 0
        %618 = vmatprep.subr.bf16.mxu0 0
        %619 = vmatpush1.bf16.msra.mxu0 0
        %620 = vmatprep.subr.bf16.mxu0 0
        %621 = vmatpush1.bf16.msra.mxu0 0
        %622 = vmatprep.subr.bf16.mxu0 0
        %623 = vmatpush1.bf16.msra.mxu0 0
        %624 = vmatprep.subr.bf16.mxu0 0
        %625 = vmatpush1.bf16.msra.mxu0 0
        %626 = vmatprep.subr.bf16.mxu0 0
        %627 = vmatpush1.bf16.msra.mxu0 0
        %628 = vmatprep.subr.bf16.mxu0 0
        %629 = vmatpush1.bf16.msra.mxu0 0
        %630 = vmatprep.mubr.bf16.mxu0 0
        %631 = vmatmul.mubr.bf16.gmra.mrb[0].mxu0 %v519
        %v632 = vpop.f32.mrb[0].mxu0
        %v633 = vadd.f32 %v490, %v632
        %v634 = vpop.f32.mrb[0].mxu0
        %v635 = vpop.f32.mrb[0].mxu0
        %v636 = vadd.f32 %v495, %v635
        %v637 = vpop.f32.mrb[0].mxu0
        %638 = vmatprep.mubr.bf16.mxu0 0
        %639 = vmatmul.mubr.bf16.gmra.mrb[0].mxu0 %v522
        %v640 = vpop.f32.mrb[0].mxu0
        %v641 = vadd.f32 %v500, %v640
        %v642 = vpop.f32.mrb[0].mxu0
        %v643 = vpop.f32.mrb[0].mxu0
        %v644 = vadd.f32 %v505, %v643
        %v645 = vpop.f32.mrb[0].mxu0
        %646 = vdwg.mxu0
        %v647 = vtanh.pop %v633
        %v648 = vtanh.pop %v636
        %v649 = vxor.u32 %v641, 2147483648
        %v650 = vxor.u32 %v644, 2147483648
        %v651 = vmul.f32 %v649, 1.442695
        %v652 = vpow.pop %v651
        %v653 = vmul.f32 %v650, 1.442695
        %v654 = vpow.pop %v653
        %v655 = vadd.f32 %v652, 1.0
        %v656 = vadd.f32 %v654, 1.0
        %v657 = vrcp.pop %v655
        %v658 = vmul.f32 1.0, %v657
        %v659 = vrcp.pop %v656
        %v660 = vmul.f32 1.0, %v659
        %v661 = vmul.f32 %v647, %v658
        %v662 = vmul.f32 %v648, %v660
        %v663 = vsub.f32 1.0, %v658
        %v664 = vsub.f32 1.0, %v660
        %v665 = vmul.f32 %v476, %v663
        %v666 = vmul.f32 %v477, %v664
        %v667 = vadd.f32 %v661, %v665
        %v668 = vadd.f32 %v662, %v666
        %s669 = scalar_lea.vmem %s272, 16 [#allocation8]
        %670 = vst.msk [vmem:[%s669] sm:$0xff] %vm351, %v667
        %671 = vst.msk [vmem:[%s669 + $0x8] sm:$0xff] %vm351, %v668
        %s672 = sand.u32 %s141, 1
        %s673 = scalar_lea.sflag [#allocation4], %s672
        %s674 = sand.u32 %s141, 1
        %s675 = smul.addr %s674, 32
        %s676 = scalar_lea.vmem [#allocation8], %s675
        // Predicated region
        $region53: #{fwd.1} parent=39 // pred_check
          %p677 = pneg %p151
        $region54: #{fwd.1} parent=39 // pred_check_branch
          %679 = sbr.rel (%p677) target = $region56
        $region55: #{fwd.1} parent=39 // pred_region
          %s680 = smul.u32 2, %s23
          %s682 = ssub.s32 512, 512
          %683 = vsyncadd %s673, %s682
          %s684 = smul.addr %s680, 2
          %s685 = smul.addr %s684, 128
          %s686 = scalar_lea.hbm %s5, %s685
          %s687 = sshll.u32 %s676, 4
          %s688 = int_to_ptr.vmem [resolvable:$true] %s687
          %693 = dma.vmem_to_hbm [thread:$0]  %s688, 512, %s686, %s673, 128, 128, 8
        $region56: #{fwd.1} parent=39 // pred_fallthru
          _
      $region40: #{fwd.1} parent=5 // pred_fallthru
        _
      %p694 = scmp.le.s32.totalorder 2, %s18
      // Predicated region
      $region57: #{fwd.1} parent=5 // pred_check
        %p695 = pneg %p694
      $region58: #{fwd.1} parent=5 // pred_check_branch
        %697 = sbr.rel (%p695) target = $region60
      $region59: #{fwd.1} parent=5 // pred_region
        %s698 = ssub.s32 %s18, 2
        // Predicated region
        $region61: #{fwd.1} parent=59 // pred_check
          %p699 = pneg %p157
        $region62: #{fwd.1} parent=59 // pred_check_branch
          %701 = sbr.rel (%p699) target = $region64
        $region63: #{fwd.1} parent=59 // pred_region
          %s702 = sand.u32 %s142, 1
          %s703 = scalar_lea.sflag [#allocation4], %s702
          %s704 = sand.u32 %s142, 1
          %s705 = smul.addr %s704, 32
          %s706 = scalar_lea.vmem [#allocation8], %s705
          %707 = dma.done %s703, 512
        $region64: #{fwd.1} parent=59 // pred_fallthru
          _
      $region60: #{fwd.1} parent=5 // pred_fallthru
        _
    $region6: #{fwd.1} parent=1 // loop_footer
      %s22 = sadd.s32 1, %s18
    $region7: #{fwd.1} parent=1 // loop_footer_branch
      %17 = sbr.rel target = $region3
    $region8: #{fwd.1} parent=1 // loop_exit
      _
    %708 = vsyncpa [#allocation3], 1
    %s709 = scalar_lea.sflag [#allocation3], 1
    %710 = vsyncpa %s709, 1
    %711 = vsyncpa [#allocation6], 1
    %712 = vsyncpa [#allocation4], 1
    %s713 = scalar_lea.sflag [#allocation4], 1
    %714 = vsyncpa %s713, 1

</llo_original>
